<compile_context>
chip_gen: v7x
topology: tpu7x:2x2x1
jax: 0.10.0
libtpu: 0.0.40
codegen_flags: <defaults>
</compile_context>

<pallas_src>
import functools

import numpy as np

import jax
import jax.numpy as jnp
from jax import lax
from jax.experimental import pallas as pl
from jax.experimental.pallas import tpu as pltpu


# ---------------------------------------------------------------------------
# Static 0/1 window matrices for the separable max-pool (trace-time constants)
# ---------------------------------------------------------------------------
def _window_matrix(n, block_size):
    """win[i, h] = 1 iff h lies in the stride-1 pool window of output i
    (kernel=block_size, padding=block_size//2, even-size crop folded in)."""
    pad = block_size // 2
    idx = np.arange(n)
    lo = idx[:, None] - pad
    hi = lo + (block_size - 1)
    return ((idx[None, :] >= lo) & (idx[None, :] <= hi)).astype(np.float32)


def _pick_tile(dim, align, cap):
    """Largest tile <= cap that divides dim and is a multiple of align;
    falls back to the full dim (always a legal block extent)."""
    if dim <= cap or dim % align != 0:
        return dim
    t = min(cap - cap % align, dim)
    while t >= align and dim % t != 0:
        t -= align
    return t if t >= align else dim


# ---------------------------------------------------------------------------
# Kernel 1: block mask + global renormalization scale (tiny, runs once)
# ---------------------------------------------------------------------------
def dropblock_mask_kernel(rand_ref, arb_ref, act_ref, mask_ref, *, gamma, numel):
    f32 = jnp.float32
    bf16 = jnp.bfloat16

    # Bernoulli(gamma) seed mask over the whole batch at once: (B*H, W).
    m = (rand_ref[...] < gamma).astype(bf16)

    # Separable stride-1 max-pool of a 0/1 mask as two 0/1 window matmuls.
    # bf16 operands are exact here (all values are small integers).
    #   u[(b,h), j]      = sum_w m[(b,h), w] * Ac[j, w]          (W direction)
    #   pooled[(b,i), j] = sum_h Ar[i, h]   * u[(b,h), j]        (H direction,
    #                      block-diagonal kron(I_B, Ar) keeps images separate)
    u = jnp.dot(m, act_ref[...], preferred_element_type=f32).astype(bf16)
    pooled = jnp.dot(arb_ref[...], u, preferred_element_type=f32)

    block = 1.0 - jnp.minimum(pooled, 1.0)                       # (B*H, W) in {0,1}
    total = jnp.sum(block)                                       # ONE global reduction
    # Matches torch exactly: numel / sum (inf/nan if everything dropped, as torch).
    scale = jnp.float32(numel) / total
    mask_ref[...] = block * scale                                # scale pre-folded


# ---------------------------------------------------------------------------
# Kernel 2: tiled, lane-dense, mem-bound apply   out = x * mask_scaled
# ---------------------------------------------------------------------------
def dropblock_apply_kernel(x_ref, m_ref, o_ref):
    # x block: (1, tc, tl)   mask block: (1, 1, tl)  -> broadcast over channels
    o_ref[...] = (x_ref[...] * m_ref[...]).astype(o_ref.dtype)


# ---------------------------------------------------------------------------
# Wrapper (the nn.Module forward)
# ---------------------------------------------------------------------------
def dropblock2d(x, key, *, drop_prob, block_size, training=True):
    assert x.ndim == 4, "Expected (B, C, H, W)"
    if (not training) or drop_prob == 0.0:
        return x                                                  # identity branch

    B, C, H, W = x.shape
    HW = H * W
    gamma = drop_prob / float(block_size ** 2)

    # Uniform draw done with jax.random (interpret-safe, TPU-fast); layout is
    # (B*H, W) so the mask kernel is a single batched computation.
    rand = jax.random.uniform(key, (B * H, W), dtype=jnp.float32)

    arb = jnp.asarray(np.kron(np.eye(B, dtype=np.float32),
                              _window_matrix(H, block_size)), dtype=jnp.bfloat16)
    act = jnp.asarray(_window_matrix(W, block_size).T, dtype=jnp.bfloat16)

    mask_scaled = pl.pallas_call(
        functools.partial(dropblock_mask_kernel, gamma=gamma, numel=B * HW),
        out_shape=jax.ShapeDtypeStruct((B * H, W), jnp.float32),
        in_specs=[pl.BlockSpec(memory_space=pltpu.MemorySpace.VMEM)] * 3,
        out_specs=pl.BlockSpec(memory_space=pltpu.MemorySpace.VMEM),
    )(rand, arb, act)

    # Lane-dense layouts for the big elementwise apply.
    x_flat = x.reshape(B, C, HW)
    mask3 = mask_scaled.reshape(B, 1, HW)

    tc = _pick_tile(C, 8, 32)         # channels per block
    tl = _pick_tile(HW, 128, 2048)    # lane tile (kept modest for v7x's VMEM)

    out = pl.pallas_call(
        dropblock_apply_kernel,
        out_shape=jax.ShapeDtypeStruct((B, C, HW), x.dtype),
        grid=(B, C // tc, HW // tl),
        in_specs=[pl.BlockSpec((1, tc, tl), lambda b, c, l: (b, c, l)),
                  pl.BlockSpec((1, 1, tl), lambda b, c, l: (b, 0, l))],
        out_specs=pl.BlockSpec((1, tc, tl), lambda b, c, l: (b, c, l)),
        compiler_params=pltpu.CompilerParams(
            dimension_semantics=("parallel", "parallel", "parallel")),
    )(x_flat, mask3)

    return out.reshape(B, C, H, W)


# ---------------------------------------------------------------------------
# Pure-JAX reference (same RNG stream as the wrapper) for a correctness check
# ---------------------------------------------------------------------------
def _dropblock_reference(x, key, drop_prob, block_size):
    B, C, H, W = x.shape
    gamma = drop_prob / float(block_size ** 2)
    rand = jax.random.uniform(key, (B * H, W), dtype=jnp.float32)
    m = (rand < gamma).astype(jnp.float32).reshape(B, H, W)
    pad = block_size // 2
    pooled = lax.reduce_window(m, -jnp.inf, lax.max,
                               (1, block_size, block_size), (1, 1, 1),
                               [(0, 0), (pad, pad), (pad, pad)])
    if block_size % 2 == 0:
        pooled = pooled[:, :-1, :-1]
    block = 1.0 - pooled
    out = x * block[:, None, :, :]
    return out * (block.size / jnp.sum(block))


if __name__ == "__main__":
    key = jax.random.PRNGKey(0)
    kx, km = jax.random.split(key)

    B, C, H, W = 2, 4, 16, 16
    x = jax.random.normal(kx, (B, C, H, W), dtype=jnp.float32)

    # Training mode: stochastic block masking + renormalization.
    db_train = jax.jit(functools.partial(dropblock2d, drop_prob=0.1,
                                         block_size=3, training=True))
    y = db_train(x, km)
    jax.block_until_ready(y)
    assert y.shape == x.shape
    assert bool(jnp.all(jnp.isfinite(y)))

    # Check against a pure-JAX reference using the exact same RNG draw.
    y_ref = _dropblock_reference(x, km, drop_prob=0.1, block_size=3)
    assert bool(jnp.allclose(y, y_ref, rtol=1e-5, atol=1e-5)), (
        float(jnp.max(jnp.abs(y - y_ref))))

    # Eval mode / drop_prob == 0 are the identity, as in the torch module.
    y_eval = dropblock2d(x, km, drop_prob=0.1, block_size=3, training=False)
    assert bool(jnp.array_equal(y_eval, x))
    y_zero = dropblock2d(x, km, drop_prob=0.0, block_size=3, training=True)
    assert bool(jnp.array_equal(y_zero, x))

    print("KERNEL_OK")
</pallas_src>

<mosaic_0001>
module attributes {stable_mosaic.version = 11 : i64} {
  func.func @dropblock_apply_kernel(%arg0: i32, %arg1: i32, %arg2: i32, %arg3: memref<1x4x256xf32, #tpu.memory_space<vmem>>, %arg4: memref<1x1x256xf32, #tpu.memory_space<vmem>>, %arg5: memref<1x4x256xf32, #tpu.memory_space<vmem>>) attributes {dimension_semantics = [#tpu.dimension_semantics<parallel>, #tpu.dimension_semantics<parallel>, #tpu.dimension_semantics<parallel>], iteration_bounds = array<i64: 2, 1, 1>, scalar_prefetch = 0 : i64, scratch_operands = 0 : i64, tpu.core_type = #tpu.core_type<tc>, window_params = [{transform_indices = @transform_0, window_bounds = array<i64: 1, 4, 256>}, {transform_indices = @transform_1, window_bounds = array<i64: 1, 1, 256>}, {transform_indices = @transform_2, window_bounds = array<i64: 1, 4, 256>}]} {
    %c0 = arith.constant 0 : index
    %c0_0 = arith.constant 0 : index
    %c0_1 = arith.constant 0 : index
    %0 = vector.load %arg3[%c0, %c0_0, %c0_1] : memref<1x4x256xf32, #tpu.memory_space<vmem>>, vector<1x4x256xf32>
    %c0_2 = arith.constant 0 : index
    %c0_3 = arith.constant 0 : index
    %c0_4 = arith.constant 0 : index
    %1 = vector.load %arg4[%c0_2, %c0_3, %c0_4] : memref<1x1x256xf32, #tpu.memory_space<vmem>>, vector<1x1x256xf32>
    %2 = vector.broadcast %1 : vector<1x1x256xf32> to vector<1x4x256xf32>
    %3 = arith.mulf %0, %2 : vector<1x4x256xf32>
    %c0_5 = arith.constant 0 : index
    %c0_6 = arith.constant 0 : index
    %c0_7 = arith.constant 0 : index
    %4 = vector.load %arg5[%c0_5, %c0_6, %c0_7] : memref<1x4x256xf32, #tpu.memory_space<vmem>>, vector<1x4x256xf32>
    tpu.vector_store %arg5[%c0_5, %c0_6, %c0_7], %3 {strides = array<i32>} : memref<1x4x256xf32, #tpu.memory_space<vmem>>, vector<1x4x256xf32>,
    return
  }
  func.func @transform_0(%arg0: i32, %arg1: i32, %arg2: i32) -> (i32, i32, i32) {
    %c0_i32 = arith.constant 0 : i32
    return %arg0, %arg1, %arg2 : i32, i32, i32
  }
  func.func @transform_1(%arg0: i32, %arg1: i32, %arg2: i32) -> (i32, i32, i32) {
    %c0_i32 = arith.constant 0 : i32
    %c0_i32_0 = arith.constant 0 : i32
    return %arg0, %c0_i32, %arg2 : i32, i32, i32
  }
  func.func @transform_2(%arg0: i32, %arg1: i32, %arg2: i32) -> (i32, i32, i32) {
    %c0_i32 = arith.constant 0 : i32
    return %arg0, %arg1, %arg2 : i32, i32, i32
  }
}

module attributes {stable_mosaic.version = 11 : i64} {
  func.func @dropblock_mask_kernel(%arg0: memref<32x16xf32, #tpu.memory_space<vmem>>, %arg1: memref<32x32xbf16, #tpu.memory_space<vmem>>, %arg2: memref<16x16xbf16, #tpu.memory_space<vmem>>, %arg3: memref<32x16xf32, #tpu.memory_space<vmem>>) attributes {dimension_semantics = [], scalar_prefetch = 0 : i64, scratch_operands = 0 : i64, tpu.core_type = #tpu.core_type<tc>} {
    %c0 = arith.constant 0 : index
    %c0_0 = arith.constant 0 : index
    %0 = vector.load %arg0[%c0, %c0_0] : memref<32x16xf32, #tpu.memory_space<vmem>>, vector<32x16xf32>
    %cst = arith.constant 0.0111111114 : f32
    %1 = vector.broadcast %cst : f32 to vector<32x16xf32>
    %2 = arith.cmpf olt, %0, %1 : vector<32x16xf32>
    %3 = arith.extui %2 : vector<32x16xi1> to vector<32x16xi32>
    %4 = arith.sitofp %3 : vector<32x16xi32> to vector<32x16xf32>
    %5 = arith.truncf %4 : vector<32x16xf32> to vector<32x16xbf16>
    %c0_1 = arith.constant 0 : index
    %c0_2 = arith.constant 0 : index
    %6 = vector.load %arg2[%c0_1, %c0_2] : memref<16x16xbf16, #tpu.memory_space<vmem>>, vector<16x16xbf16>
    %cst_3 = arith.constant dense<0.000000e+00> : vector<32x16xf32>
    %7 = tpu.matmul %5, %6, %cst_3 {dimension_numbers = #tpu.dot_dimension_numbers<[1], [0], [0], [1], [0, 0, 1, 1], [], []>} : vector<32x16xbf16>, vector<16x16xbf16>, vector<32x16xf32> -> vector<32x16xf32>
    %8 = arith.truncf %7 : vector<32x16xf32> to vector<32x16xbf16>
    %c0_4 = arith.constant 0 : index
    %c0_5 = arith.constant 0 : index
    %9 = vector.load %arg1[%c0_4, %c0_5] : memref<32x32xbf16, #tpu.memory_space<vmem>>, vector<32x32xbf16>
    %cst_6 = arith.constant dense<0.000000e+00> : vector<32x16xf32>
    %10 = tpu.matmul %9, %8, %cst_6 {dimension_numbers = #tpu.dot_dimension_numbers<[1], [0], [0], [1], [0, 0, 1, 1], [], []>} : vector<32x32xbf16>, vector<32x16xbf16>, vector<32x16xf32> -> vector<32x16xf32>
    %cst_7 = arith.constant 1.000000e+00 : f32
    %11 = vector.broadcast %cst_7 : f32 to vector<32x16xf32>
    %12 = arith.minimumf %10, %11 : vector<32x16xf32>
    %cst_8 = arith.constant 1.000000e+00 : f32
    %13 = vector.broadcast %cst_8 : f32 to vector<32x16xf32>
    %14 = arith.subf %13, %12 : vector<32x16xf32>
    %15 = vector.shape_cast %14 : vector<32x16xf32> to vector<1x32x16xf32>
    %cst_9 = arith.constant dense<0.000000e+00> : vector<1xf32>
    %16 = vector.multi_reduction <add>, %15, %cst_9 [1, 2] : vector<1x32x16xf32> to vector<1xf32>
    %17 = vector.shape_cast %16 : vector<1xf32> to vector<1x1x1xf32>
    %18 = vector.extract %17[0, 0, 0] : f32 from vector<1x1x1xf32>
    %cst_10 = arith.constant 5.120000e+02 : f32
    %19 = arith.divf %cst_10, %18 : f32
    %20 = vector.broadcast %19 : f32 to vector<32x16xf32>
    %21 = arith.mulf %14, %20 : vector<32x16xf32>
    %c0_11 = arith.constant 0 : index
    %c0_12 = arith.constant 0 : index
    %22 = vector.load %arg3[%c0_11, %c0_12] : memref<32x16xf32, #tpu.memory_space<vmem>>, vector<32x16xf32>
    tpu.vector_store %arg3[%c0_11, %c0_12], %21 {strides = array<i32>} : memref<32x16xf32, #tpu.memory_space<vmem>>, vector<32x16xf32>,
    return
  }
}

</mosaic_0001>

<llo_original>
// kernel: dropblock2d.3
$region0: #{dropblock2d.3}
  #allocation0 [shape = 'u32[]', space=smem, size = 0x4, offset = 0x4, fixed_abs, tag = 'smem constant byte address 0x4 - core index']
  #allocation1 [shape = 'u32[144,128]{1,0:T(1,128)}', space=vmem, size = 0x12000, scoped, tag = 'internal scratch']
  %s0 = inlined_call_operand.vmem [shape: f32[2,4,256], index: 0, kind: input, shape index: {}]
  %s1 = inlined_call_operand.vmem [shape: f32[2,1,256], index: 1, kind: input, shape index: {}]
  %s2 = inlined_call_operand.vmem [shape: f32[2,4,256], index: 2, kind: output, shape index: {}]
  %s3 = sld [smem:[#allocation0]]
  $region41: #{dropblock2d.3} parent=0
    _
  %s5 = ssub.s32 1, %s3
  %s6 = scalar_select 0, %s5, %s3
  loop: start=0, step=1, limit=4
  $region2: #{dropblock2d.3} parent=0 // loop_pre_header
    _
  $region3: #{dropblock2d.3} parent=0 // loop_header
    %s8 = sphi 0, %s12
    %p9 = scmp.ge.s32.totalorder %s8, 4
    %s15 = sphi 0, %s34
    %s16 = sphi 0, %s30
    %s17 = sphi 0, %s26
    %s18 = sphi 0, %s15
    %s19 = sphi 0, %s16
    %s20 = sphi 0, %s17
    %s21 = sphi 0, %s18
    %s22 = sphi 0, %s19
    %s23 = sphi 0, %s20
    %s41 = sphi 0, %s43
    %s44 = sphi 0, %s41
    %s45 = sphi 0, %s44
    %s61 = sphi 0, %s45
    %s69 = sphi 0, %s71
    %s72 = sphi 0, %s69
    %s73 = sphi 0, %s72
    %s89 = sphi 0, %s73
    %s99 = sphi 0, %s101
    %s102 = sphi 0, %s99
    %s103 = sphi 0, %s102
    %s119 = sphi 0, %s103
  $region4: #{dropblock2d.3} parent=0 // loop_header_branch
    %11 = sbr.rel (%p9) target = $region8
  $region5: #{dropblock2d.3} parent=0 // loop_body
    %s13 = ssub.s32 %s8, 1
    %s14 = ssub.s32 %s8, 2
    %s24 = sadd.s32 1, %s17
    %p25 = scmp.ge.s32.totalorder %s24, 1
    %s26 = scalar_select %p25, 0, %s24
    %s27 = sadd.s32 1, %s16
    %s28 = scalar_select %p25, %s27, %s16
    %p29 = scmp.ge.s32.totalorder %s28, 1
    %s30 = scalar_select %p29, 0, %s28
    %s31 = sadd.s32 1, %s15
    %s32 = scalar_select %p29, %s31, %s15
    %p33 = scmp.ge.s32.totalorder %s32, 2
    %s34 = scalar_select %p33, 0, %s32
    %s35 = ssub.s32 %s15, %s34
    %s36 = ssub.s32 %s16, %s30
    %s37 = sor.u32 %s35, %s36
    %s38 = ssub.s32 %s17, %s26
    %s39 = sor.u32 %s37, %s38
    %p40 = scmp.eq.s32.totalorder %s39, 0
    %s42 = sadd.s32 %s41, 1
    %s43 = scalar_select %p40, %s41, %s42
    %p46 = pneg %p40
    %p47 = scmp.eq.s32.totalorder %s8, 1
    %p48 = por %p46, %p47
    %p49 = scmp.ne.s32.totalorder %s41, %s44
    %p50 = scmp.eq.s32.totalorder %s8, 0
    %p51 = por %p49, %p50
    %p52 = scmp.ne.s32.totalorder %s41, %s44
    %p53 = scmp.eq.s32.totalorder %s13, 1
    %p54 = por %p52, %p53
    %p55 = scmp.ne.s32.totalorder %s44, %s45
    %p56 = scmp.eq.s32.totalorder %s13, 0
    %p57 = por %p55, %p56
    %p58 = scmp.ne.s32.totalorder %s44, %s45
    %p59 = scmp.eq.s32.totalorder %s14, 1
    %p60 = por %p58, %p59
    %p62 = scmp.ne.s32.totalorder %s45, %s61
    %p63 = scmp.eq.s32.totalorder %s14, 0
    %p64 = por %p62, %p63
    %s65 = ssub.s32 %s15, %s34
    %s66 = ssub.s32 %s17, %s26
    %s67 = sor.u32 %s65, %s66
    %p68 = scmp.eq.s32.totalorder %s67, 0
    %s70 = sadd.s32 %s69, 1
    %s71 = scalar_select %p68, %s69, %s70
    %p74 = pneg %p68
    %p75 = scmp.eq.s32.totalorder %s8, 1
    %p76 = por %p74, %p75
    %p77 = scmp.ne.s32.totalorder %s69, %s72
    %p78 = scmp.eq.s32.totalorder %s8, 0
    %p79 = por %p77, %p78
    %p80 = scmp.ne.s32.totalorder %s69, %s72
    %p81 = scmp.eq.s32.totalorder %s13, 1
    %p82 = por %p80, %p81
    %p83 = scmp.ne.s32.totalorder %s72, %s73
    %p84 = scmp.eq.s32.totalorder %s13, 0
    %p85 = por %p83, %p84
    %p86 = scmp.ne.s32.totalorder %s72, %s73
    %p87 = scmp.eq.s32.totalorder %s14, 1
    %p88 = por %p86, %p87
    %p90 = scmp.ne.s32.totalorder %s73, %s89
    %p91 = scmp.eq.s32.totalorder %s14, 0
    %p92 = por %p90, %p91
    %s93 = ssub.s32 %s15, %s34
    %s94 = ssub.s32 %s16, %s30
    %s95 = sor.u32 %s93, %s94
    %s96 = ssub.s32 %s17, %s26
    %s97 = sor.u32 %s95, %s96
    %p98 = scmp.eq.s32.totalorder %s97, 0
    %s100 = sadd.s32 %s99, 1
    %s101 = scalar_select %p98, %s99, %s100
    %p104 = pneg %p98
    %p105 = scmp.eq.s32.totalorder %s8, 1
    %p106 = por %p104, %p105
    %p107 = scmp.ne.s32.totalorder %s99, %s102
    %p108 = scmp.eq.s32.totalorder %s8, 0
    %p109 = por %p107, %p108
    %p110 = scmp.ne.s32.totalorder %s99, %s102
    %p111 = scmp.eq.s32.totalorder %s13, 1
    %p112 = por %p110, %p111
    %p113 = scmp.ne.s32.totalorder %s102, %s103
    %p114 = scmp.eq.s32.totalorder %s13, 0
    %p115 = por %p113, %p114
    %p116 = scmp.ne.s32.totalorder %s102, %s103
    %p117 = scmp.eq.s32.totalorder %s14, 1
    %p118 = por %p116, %p117
    %p120 = scmp.ne.s32.totalorder %s103, %s119
    %p121 = scmp.eq.s32.totalorder %s14, 0
    %p122 = por %p120, %p121
    %p123 = scmp.le.s32.totalorder 1, %s8
    %p124 = scmp.lt.s32.totalorder %s8, 3
    %p125 = pnand %p123, %p124
    %p126 = pneg %p125
    // Predicated region
    $region9: #{dropblock2d.3} parent=5 // pred_check
      _
    $region10: #{dropblock2d.3} parent=5 // pred_check_branch
      %128 = sbr.rel (%p125) target = $region12
    $region11: #{dropblock2d.3} parent=5 // pred_region
      %s129 = ssub.s32 %s8, 1
    $region12: #{dropblock2d.3} parent=5 // pred_fallthru
      _
    %p130 = scmp.lt.s32.totalorder %s8, 2
    // Predicated region
    $region13: #{dropblock2d.3} parent=5 // pred_check
      %p131 = pneg %p130
    $region14: #{dropblock2d.3} parent=5 // pred_check_branch
      %133 = sbr.rel (%p131) target = $region16
    $region15: #{dropblock2d.3} parent=5 // pred_region
      // Predicated region
      $region17: #{dropblock2d.3} parent=15 // pred_check
        %p134 = pneg %p51
      $region18: #{dropblock2d.3} parent=15 // pred_check_branch
        %136 = sbr.rel (%p134) target = $region20
      $region19: #{dropblock2d.3} parent=15 // pred_region
        %s137 = smul.u32 2, %s17
        %p138 = scmp.lt.s32.totalorder %s15, 1
        %s139 = scalar_select %p138, %s15, 1
        %p140 = scmp.lt.s32.totalorder %s16, 0
        %s141 = scalar_select %p140, %s16, 0
        %p142 = scmp.lt.s32.totalorder %s137, 1
        %s143 = scalar_select %p142, %s137, 1
        %s144 = smul.addr %s141, 2
        %s145 = sadd.s32 %s143, %s144
        %s146 = smul.addr %s139, 2
        %s147 = sadd.s32 %s145, %s146
        %s148 = smul.addr %s147, 4
        %s149 = scalar_lea.vmem %s0, %s148
        %s150 = smul.u32 2, %s17
      $region20: #{dropblock2d.3} parent=15 // pred_fallthru
        _
      // Predicated region
      $region21: #{dropblock2d.3} parent=15 // pred_check
        %p151 = pneg %p79
      $region22: #{dropblock2d.3} parent=15 // pred_check_branch
        %153 = sbr.rel (%p151) target = $region24
      $region23: #{dropblock2d.3} parent=15 // pred_region
        %s154 = smul.u32 2, %s17
        %p155 = scmp.lt.s32.totalorder %s15, 1
        %s156 = scalar_select %p155, %s15, 1
        %p157 = scmp.lt.s32.totalorder %s154, 1
        %s158 = scalar_select %p157, %s154, 1
        %s159 = smul.addr %s156, 2
        %s160 = sadd.s32 %s158, %s159
        %s161 = scalar_lea.vmem %s1, %s160
        %s162 = smul.u32 2, %s17
      $region24: #{dropblock2d.3} parent=15 // pred_fallthru
        _
    $region16: #{dropblock2d.3} parent=5 // pred_fallthru
      _
    %p163 = scmp.le.s32.totalorder 1, %s8
    %p164 = scmp.lt.s32.totalorder %s8, 3
    %p165 = pnand %p163, %p164
    %p166 = pneg %p165
    // Predicated region
    $region25: #{dropblock2d.3} parent=5 // pred_check
      _
    $region26: #{dropblock2d.3} parent=5 // pred_check_branch
      %168 = sbr.rel (%p165) target = $region28
    $region27: #{dropblock2d.3} parent=5 // pred_region
      %s169 = ssub.s32 %s8, 1
      %s170 = smul.u32 2, %s20
      %p171 = scmp.lt.s32.totalorder %s18, 1
      %s172 = scalar_select %p171, %s18, 1
      %p173 = scmp.lt.s32.totalorder %s19, 0
      %s174 = scalar_select %p173, %s19, 0
      %p175 = scmp.lt.s32.totalorder %s170, 1
      %s176 = scalar_select %p175, %s170, 1
      %s177 = smul.addr %s174, 2
      %s178 = sadd.s32 %s176, %s177
      %s179 = smul.addr %s172, 2
      %s180 = sadd.s32 %s178, %s179
      %s181 = smul.addr %s180, 4
      %s182 = scalar_lea.vmem %s0, %s181
      %p183 = pneg %p57
      %p184 = pneg %p54
      %s185 = smul.u32 2, %s20
      %p186 = scmp.lt.s32.totalorder %s18, 1
      %s187 = scalar_select %p186, %s18, 1
      %p188 = scmp.lt.s32.totalorder %s185, 1
      %s189 = scalar_select %p188, %s185, 1
      %s190 = smul.addr %s187, 2
      %s191 = sadd.s32 %s189, %s190
      %s192 = scalar_lea.vmem %s1, %s191
      %p193 = pneg %p85
      %p194 = pneg %p82
      %p195 = pneg %p115
      %p196 = pneg %p112
      %s197 = smul.u32 2, %s20
      %p198 = scmp.lt.s32.totalorder %s18, 1
      %s199 = scalar_select %p198, %s18, 1
      %p200 = scmp.lt.s32.totalorder %s19, 0
      %s201 = scalar_select %p200, %s19, 0
      %p202 = scmp.lt.s32.totalorder %s197, 1
      %s203 = scalar_select %p202, %s197, 1
      %s204 = smul.addr %s201, 2
      %s205 = sadd.s32 %s203, %s204
      %s206 = smul.addr %s199, 2
      %s207 = sadd.s32 %s205, %s206
      %s208 = smul.addr %s207, 4
      %s209 = scalar_lea.vmem %s2, %s208
      %s210 = smul.u32 2, %s20
      %p211 = scmp.lt.s32.totalorder %s18, 1
      %s212 = scalar_select %p211, %s18, 1
      %p213 = scmp.lt.s32.totalorder %s19, 0
      %s214 = scalar_select %p213, %s19, 0
      %p215 = scmp.lt.s32.totalorder %s210, 1
      %s216 = scalar_select %p215, %s210, 1
      %s217 = smul.addr %s214, 2
      %s218 = sadd.s32 %s216, %s217
      %s219 = smul.addr %s212, 2
      %s220 = sadd.s32 %s218, %s219
      %s221 = smul.addr %s220, 4
      %s222 = scalar_lea.vmem %s0, %s221
      %s223 = smul.u32 2, %s20
      %s224 = smul.u32 2, %s20
      %p225 = scmp.lt.s32.totalorder %s18, 1
      %s226 = scalar_select %p225, %s18, 1
      %p227 = scmp.lt.s32.totalorder %s224, 1
      %s228 = scalar_select %p227, %s224, 1
      %s229 = smul.addr %s226, 2
      %s230 = sadd.s32 %s228, %s229
      %s231 = scalar_lea.vmem %s1, %s230
      %s232 = smul.u32 2, %s20
      %s233 = smul.u32 2, %s20
      %p234 = scmp.lt.s32.totalorder %s18, 1
      %s235 = scalar_select %p234, %s18, 1
      %p236 = scmp.lt.s32.totalorder %s19, 0
      %s237 = scalar_select %p236, %s19, 0
      %p238 = scmp.lt.s32.totalorder %s233, 1
      %s239 = scalar_select %p238, %s233, 1
      %s240 = smul.addr %s237, 2
      %s241 = sadd.s32 %s239, %s240
      %s242 = smul.addr %s235, 2
      %s243 = sadd.s32 %s241, %s242
      %s244 = smul.addr %s243, 4
      %s245 = scalar_lea.vmem %s2, %s244
      %s246 = smul.u32 2, %s20
      %v247 = vld [vmem:[%s222] sm:$0xff]
      %v248 = vld [vmem:[%s231] sm:$0x3]
      %v250 = vlaneseq
      %v251 = vshrl.u32 %v250, 7
      %v252 = vsub.s32 0, %v251
      %v253 = vrot.slane %v248, %v252
      %v254 = vlaneseq
      %v255 = vshrl.u32 %v254, 7
      %v256 = vsub.s32 1, %v255
      %v257 = vrot.slane %v248, %v256
      %v258 = vcombine.low %v253, %v257
      %v260 = vmul.f32 %v247, %v258
      %261 = vst [vmem:[%s245] sm:$0xff] %v260
      %s262 = smul.u32 2, %s20
      %p263 = scmp.lt.s32.totalorder %s18, 1
      %s264 = scalar_select %p263, %s18, 1
      %p265 = scmp.lt.s32.totalorder %s19, 0
      %s266 = scalar_select %p265, %s19, 0
      %p267 = scmp.lt.s32.totalorder %s262, 1
      %s268 = scalar_select %p267, %s262, 1
      %s269 = smul.addr %s266, 2
      %s270 = sadd.s32 %s268, %s269
      %s271 = smul.addr %s264, 2
      %s272 = sadd.s32 %s270, %s271
      %s273 = smul.addr %s272, 4
      %s274 = scalar_lea.vmem %s2, %s273
      // Predicated region
      $region29: #{dropblock2d.3} parent=27 // pred_check
        %p275 = pneg %p112
      $region30: #{dropblock2d.3} parent=27 // pred_check_branch
        %277 = sbr.rel (%p275) target = $region32
      $region31: #{dropblock2d.3} parent=27 // pred_region
        %s278 = smul.u32 2, %s20
      $region32: #{dropblock2d.3} parent=27 // pred_fallthru
        _
    $region28: #{dropblock2d.3} parent=5 // pred_fallthru
      _
    %p279 = scmp.le.s32.totalorder 2, %s8
    // Predicated region
    $region33: #{dropblock2d.3} parent=5 // pred_check
      %p280 = pneg %p279
    $region34: #{dropblock2d.3} parent=5 // pred_check_branch
      %282 = sbr.rel (%p280) target = $region36
    $region35: #{dropblock2d.3} parent=5 // pred_region
      %s283 = ssub.s32 %s8, 2
      // Predicated region
      $region37: #{dropblock2d.3} parent=35 // pred_check
        %p284 = pneg %p118
      $region38: #{dropblock2d.3} parent=35 // pred_check_branch
        %286 = sbr.rel (%p284) target = $region40
      $region39: #{dropblock2d.3} parent=35 // pred_region
        %s287 = smul.u32 2, %s23
        %p288 = scmp.lt.s32.totalorder %s21, 1
        %s289 = scalar_select %p288, %s21, 1
        %p290 = scmp.lt.s32.totalorder %s22, 0
        %s291 = scalar_select %p290, %s22, 0
        %p292 = scmp.lt.s32.totalorder %s287, 1
        %s293 = scalar_select %p292, %s287, 1
        %s294 = smul.addr %s291, 2
        %s295 = sadd.s32 %s293, %s294
        %s296 = smul.addr %s289, 2
        %s297 = sadd.s32 %s295, %s296
        %s298 = smul.addr %s297, 4
        %s299 = scalar_lea.vmem %s2, %s298
      $region40: #{dropblock2d.3} parent=35 // pred_fallthru
        _
    $region36: #{dropblock2d.3} parent=5 // pred_fallthru
      _
  $region6: #{dropblock2d.3} parent=0 // loop_footer
    %s12 = sadd.s32 1, %s8
  $region7: #{dropblock2d.3} parent=0 // loop_footer_branch
    %7 = sbr.rel target = $region3
  $region8: #{dropblock2d.3} parent=0 // loop_exit
    _

// kernel: dropblock2d.2
$region0: #{dropblock2d.2}
  #allocation0 [shape = 'u32[]', space=smem, size = 0x4, offset = 0x4, fixed_abs, tag = 'smem constant byte address 0x4 - core index']
  #allocation1 [shape = 'u32[144,128]{1,0:T(1,128)}', space=vmem, size = 0x12000, scoped, tag = 'internal scratch']
  %s0 = inlined_call_operand.vmem [shape: f32[32,16], index: 0, kind: input, shape index: {}]
  %s1 = inlined_call_operand.vmem [shape: bf16[32,32], index: 1, kind: input, shape index: {}]
  %s2 = inlined_call_operand.vmem [shape: bf16[16,16], index: 2, kind: input, shape index: {}]
  %s3 = inlined_call_operand.vmem [shape: f32[32,16], index: 3, kind: output, shape index: {}]
  %s4 = sld [smem:[#allocation0]]
  $region22: #{dropblock2d.2} parent=0
    _
  %s6 = ssub.s32 1, %s4
  %s7 = scalar_select 0, %s6, %s4
  // Predicated region
  $region2: #{dropblock2d.2} parent=0 // pred_check
    _
  $region3: #{dropblock2d.2} parent=0 // pred_check_branch
    %9 = sbr.rel (0) target = $region5
  $region4: #{dropblock2d.2} parent=0 // pred_region
    _
  $region5: #{dropblock2d.2} parent=0 // pred_fallthru
    _
  // Predicated region
  $region6: #{dropblock2d.2} parent=0 // pred_check
    _
  $region7: #{dropblock2d.2} parent=0 // pred_check_branch
    %11 = sbr.rel (0) target = $region9
  $region8: #{dropblock2d.2} parent=0 // pred_region
    _
  $region9: #{dropblock2d.2} parent=0 // pred_fallthru
    _
  // Predicated region
  $region10: #{dropblock2d.2} parent=0 // pred_check
    _
  $region11: #{dropblock2d.2} parent=0 // pred_check_branch
    %13 = sbr.rel (0) target = $region13
  $region12: #{dropblock2d.2} parent=0 // pred_region
    _
  $region13: #{dropblock2d.2} parent=0 // pred_fallthru
    _
  %v15 = vld [vmem:[%s0] sm:$0xff]
  %v16 = vld [vmem:[%s0 + $0x8] sm:$0xff]
  %v17 = vld [vmem:[%s0 + $0x10] sm:$0xff]
  %v18 = vld [vmem:[%s0 + $0x18] sm:$0xff]
  %vm19 = vcmp.lt.f32.partialorder %v15, 0.011111111
  %vm20 = vcmp.lt.f32.partialorder %v16, 0.011111111
  %vm21 = vcmp.lt.f32.partialorder %v17, 0.011111111
  %vm22 = vcmp.lt.f32.partialorder %v18, 0.011111111
  %v23 = vsel %vm19, 1, 0
  %v24 = vsel %vm20, 1, 0
  %v25 = vsel %vm21, 1, 0
  %v26 = vsel %vm22, 1, 0
  %v27 = vcvt.s32.f32 %v23
  %v28 = vcvt.s32.f32 %v24
  %v29 = vcvt.s32.f32 %v25
  %v30 = vcvt.s32.f32 %v26
  %v31 = vpack.c.bf16 %v28, %v27
  %v32 = vpack.c.bf16 %v30, %v29
  %v33 = vld [vmem:[%s2] sm:$0xf]
  %v34 = vld [vmem:[%s2 + $0x4] sm:$0xf]
  %v37 = vunpack.c.l.b16 %v33
  %v38 = vunpack.c.l.b16 %v34
  %v39 = vpack.c.b16 %v38, %v37
  %vm41 = vcmask 130048
  %v43 = vsel %vm41, %v31, 0
  %v46 = vsel %vm41, %v32, 0
  %48 = vmatprep.subr.bf16.mxu0 0
  %49 = vmatpush1.bf16.msra.mxu0 %v39
  %50 = vmatprep.subr.bf16.mxu0 0
  %51 = vmatpush1.bf16.msra.mxu0 0
  %52 = vmatprep.subr.bf16.mxu0 0
  %53 = vmatpush1.bf16.msra.mxu0 0
  %54 = vmatprep.subr.bf16.mxu0 0
  %55 = vmatpush1.bf16.msra.mxu0 0
  %56 = vmatprep.subr.bf16.mxu0 0
  %57 = vmatpush1.bf16.msra.mxu0 0
  %58 = vmatprep.subr.bf16.mxu0 0
  %59 = vmatpush1.bf16.msra.mxu0 0
  %60 = vmatprep.subr.bf16.mxu0 0
  %61 = vmatpush1.bf16.msra.mxu0 0
  %62 = vmatprep.subr.bf16.mxu0 0
  %63 = vmatpush1.bf16.msra.mxu0 0
  %64 = vmatprep.subr.bf16.mxu0 0
  %65 = vmatpush1.bf16.msra.mxu0 0
  %66 = vmatprep.subr.bf16.mxu0 0
  %67 = vmatpush1.bf16.msra.mxu0 0
  %68 = vmatprep.subr.bf16.mxu0 0
  %69 = vmatpush1.bf16.msra.mxu0 0
  %70 = vmatprep.subr.bf16.mxu0 0
  %71 = vmatpush1.bf16.msra.mxu0 0
  %72 = vmatprep.subr.bf16.mxu0 0
  %73 = vmatpush1.bf16.msra.mxu0 0
  %74 = vmatprep.subr.bf16.mxu0 0
  %75 = vmatpush1.bf16.msra.mxu0 0
  %76 = vmatprep.subr.bf16.mxu0 0
  %77 = vmatpush1.bf16.msra.mxu0 0
  %78 = vmatprep.subr.bf16.mxu0 0
  %79 = vmatpush1.bf16.msra.mxu0 0
  %80 = vmatprep.mubr.bf16.mxu0 0
  %81 = vmatmul.mubr.bf16.gmra.mrb[0].mxu0 %v43
  %v82 = vpop.f32.mrb[0].mxu0
  %v83 = vadd.f32 0.0, %v82
  %v84 = vpop.f32.mrb[0].mxu0
  %v85 = vpop.f32.mrb[0].mxu0
  %v86 = vadd.f32 0.0, %v85
  %v87 = vpop.f32.mrb[0].mxu0
  %88 = vmatprep.mubr.bf16.mxu0 0
  %89 = vmatmul.mubr.bf16.gmra.mrb[0].mxu0 %v46
  %v90 = vpop.f32.mrb[0].mxu0
  %v91 = vadd.f32 0.0, %v90
  %v92 = vpop.f32.mrb[0].mxu0
  %v93 = vpop.f32.mrb[0].mxu0
  %v94 = vadd.f32 0.0, %v93
  %v95 = vpop.f32.mrb[0].mxu0
  %96 = vdwg.mxu0
  %v97 = vpack.c.bf16 %v86, %v83
  %v98 = vpack.c.bf16 %v94, %v91
  %v99 = vld [vmem:[%s1] sm:$0xf]
  %v100 = vld [vmem:[%s1 + $0x4] sm:$0xf]
  %v101 = vld [vmem:[%s1 + $0x8] sm:$0xf]
  %v102 = vld [vmem:[%s1 + $0xc] sm:$0xf]
  %v107 = vunpack.c.l.b16 %v99
  %v108 = vunpack.c.l.b16 %v100
  %v109 = vunpack.c.l.b16 %v101
  %v110 = vunpack.c.l.b16 %v102
  %v111 = vpack.c.b16 %v108, %v107
  %v112 = vpack.c.b16 %v110, %v109
  %vm113 = vcmask 261120
  %v115 = vsel %vm113, %v111, 0
  %v118 = vsel %vm113, %v112, 0
  %120 = vmatprep.subr.bf16.mxu0 0
  %121 = vmatpush1.bf16.msra.mxu0 %v97
  %122 = vmatprep.subr.bf16.mxu0 0
  %123 = vmatpush1.bf16.msra.mxu0 %v98
  %124 = vmatprep.subr.bf16.mxu0 0
  %125 = vmatpush1.bf16.msra.mxu0 0
  %126 = vmatprep.subr.bf16.mxu0 0
  %127 = vmatpush1.bf16.msra.mxu0 0
  %128 = vmatprep.subr.bf16.mxu0 0
  %129 = vmatpush1.bf16.msra.mxu0 0
  %130 = vmatprep.subr.bf16.mxu0 0
  %131 = vmatpush1.bf16.msra.mxu0 0
  %132 = vmatprep.subr.bf16.mxu0 0
  %133 = vmatpush1.bf16.msra.mxu0 0
  %134 = vmatprep.subr.bf16.mxu0 0
  %135 = vmatpush1.bf16.msra.mxu0 0
  %136 = vmatprep.subr.bf16.mxu0 0
  %137 = vmatpush1.bf16.msra.mxu0 0
  %138 = vmatprep.subr.bf16.mxu0 0
  %139 = vmatpush1.bf16.msra.mxu0 0
  %140 = vmatprep.subr.bf16.mxu0 0
  %141 = vmatpush1.bf16.msra.mxu0 0
  %142 = vmatprep.subr.bf16.mxu0 0
  %143 = vmatpush1.bf16.msra.mxu0 0
  %144 = vmatprep.subr.bf16.mxu0 0
  %145 = vmatpush1.bf16.msra.mxu0 0
  %146 = vmatprep.subr.bf16.mxu0 0
  %147 = vmatpush1.bf16.msra.mxu0 0
  %148 = vmatprep.subr.bf16.mxu0 0
  %149 = vmatpush1.bf16.msra.mxu0 0
  %150 = vmatprep.subr.bf16.mxu0 0
  %151 = vmatpush1.bf16.msra.mxu0 0
  %152 = vmatprep.mubr.bf16.mxu0 0
  %153 = vmatmul.mubr.bf16.gmra.mrb[0].mxu0 %v115
  %v154 = vpop.f32.mrb[0].mxu0
  %v155 = vadd.f32 0.0, %v154
  %v156 = vpop.f32.mrb[0].mxu0
  %v157 = vpop.f32.mrb[0].mxu0
  %v158 = vadd.f32 0.0, %v157
  %v159 = vpop.f32.mrb[0].mxu0
  %160 = vmatprep.mubr.bf16.mxu0 0
  %161 = vmatmul.mubr.bf16.gmra.mrb[0].mxu0 %v118
  %v162 = vpop.f32.mrb[0].mxu0
  %v163 = vadd.f32 0.0, %v162
  %v164 = vpop.f32.mrb[0].mxu0
  %v165 = vpop.f32.mrb[0].mxu0
  %v166 = vadd.f32 0.0, %v165
  %v167 = vpop.f32.mrb[0].mxu0
  %168 = vdwg.mxu0
  %v169 = vmin.f32 %v155, 1.0
  %v170 = vmin.f32 %v158, 1.0
  %v171 = vmin.f32 %v163, 1.0
  %v172 = vmin.f32 %v166, 1.0
  %v173 = vsub.f32 1.0, %v169
  %v174 = vsub.f32 1.0, %v170
  %v175 = vsub.f32 1.0, %v171
  %v176 = vsub.f32 1.0, %v172
  %v177 = vsel %vm41, %v173, 0.0
  %v178 = vsel %vm41, %v174, 0.0
  %v179 = vadd.f32 %v177, %v178
  %v180 = vsel %vm41, %v175, 0.0
  %v181 = vadd.f32 %v179, %v180
  %v182 = vsel %vm41, %v176, 0.0
  %v183 = vadd.f32 %v181, %v182
  %184 = vadd.xlane.f32.xlu0 %v183
  %v185 = vpop.xlane.xlu0 %184
  %v186 = vrot.slane %v185, 4
  %v187 = vadd.f32 %v185, %v186
  %v188 = vrot.slane %v187, 2
  %v189 = vadd.f32 %v187, %v188
  %v190 = vrot.slane %v189, 1
  %v191 = vadd.f32 %v189, %v190
  %s192 = vtos %v191
  %v193 = vstv %s192
  %v194 = vrcp.pop %v193
  %s195 = vtos %v194
  %s196 = smul.f32 512.0, %s195
  %v197 = vstv %s196
  %v198 = vmul.f32 %v173, %v197
  %v199 = vmul.f32 %v174, %v197
  %v200 = vmul.f32 %v175, %v197
  %v201 = vmul.f32 %v176, %v197
  %202 = vst.msk [vmem:[%s3] sm:$0xff] %vm41, %v198
  %203 = vst.msk [vmem:[%s3 + $0x8] sm:$0xff] %vm41, %v199
  %204 = vst.msk [vmem:[%s3 + $0x10] sm:$0xff] %vm41, %v200
  %205 = vst.msk [vmem:[%s3 + $0x18] sm:$0xff] %vm41, %v201
  // Predicated region
  $region14: #{dropblock2d.2} parent=0 // pred_check
    _
  $region15: #{dropblock2d.2} parent=0 // pred_check_branch
    %207 = sbr.rel (0) target = $region17
  $region16: #{dropblock2d.2} parent=0 // pred_region
    _
  $region17: #{dropblock2d.2} parent=0 // pred_fallthru
    _
  // Predicated region
  $region18: #{dropblock2d.2} parent=0 // pred_check
    _
  $region19: #{dropblock2d.2} parent=0 // pred_check_branch
    %209 = sbr.rel (0) target = $region21
  $region20: #{dropblock2d.2} parent=0 // pred_region
    _
  $region21: #{dropblock2d.2} parent=0 // pred_fallthru
    _

</llo_original>
